<compile_context>
chip_gen: v5e
topology: v5e:2x2
jax: 0.10.0
libtpu: 0.0.40
codegen_flags: <defaults>
</compile_context>

<pallas_src>
import jax
import jax.numpy as jnp
from jax.experimental import pallas as pl
from jax.experimental.pallas import tpu as pltpu


# --------------------------- fused forward kernel ----------------------------
def fused_neural_lm_kernel(x_ref, wih_ref, whh_ref, b_ref,
                           wd_ref, bd_ref, wc_ref, bc_ref,
                           out_ref, h_buf):
    """embedded (B,T,E) -> logits (B*T,V), everything in one kernel."""
    B, T, E = x_ref.shape
    H = whh_ref.shape[0]

    # ---- hoisted input projection: one matmul for ALL timesteps ------------
    x_flat = x_ref[...].reshape(B * T, E)                       # (B*T, E)
    gates_x = (
        jnp.dot(x_flat, wih_ref[...], preferred_element_type=jnp.float32)
        + b_ref[...]                                            # bias folded here
    ).reshape(B, T, 4 * H)                                      # (B, T, 4H)

    whh = whh_ref[...]                                          # (H, 4H), stays in vregs
    h = jnp.zeros((B, H), jnp.float32)
    c = jnp.zeros((B, H), jnp.float32)

    # ---- LSTM recurrence, fully unrolled (T small & static) ----------------
    # Only the recurrent h @ W_hh matmul sits on the serial critical path.
    for t in range(T):
        g = gates_x[:, t, :] + jnp.dot(h, whh,
                                       preferred_element_type=jnp.float32)
        # PyTorch gate order: input, forget, cell(g), output
        i_g = jax.nn.sigmoid(g[:, 0 * H:1 * H])
        f_g = jax.nn.sigmoid(g[:, 1 * H:2 * H])
        g_g = jnp.tanh(g[:, 2 * H:3 * H])
        o_g = jax.nn.sigmoid(g[:, 3 * H:4 * H])
        c = f_g * c + i_g * g_g
        h = o_g * jnp.tanh(c)
        h_buf[:, t, :] = h            # batch-first layout; later reshape is free

    # ---- MLP head, batched over all B*T rows (two MXU matmuls) -------------
    flat = h_buf[...].reshape(B * T, H)                         # == .view(-1, H)
    a0 = jnp.maximum(flat, 0.0)                                 # ReLU
    d = jnp.dot(a0, wd_ref[...], preferred_element_type=jnp.float32) + bd_ref[...]
    d = jnp.maximum(d, 0.0)                                     # ReLU
    out_ref[...] = (
        jnp.dot(d, wc_ref[...], preferred_element_type=jnp.float32) + bc_ref[...]
    )


# ------------------------------ wrapper --------------------------------------
def neural_lm_forward(inp, params):
    """inp: (B, T) int32 token ids -> logits (B*T, vocab)."""
    emb_table = params["embeddings"]                  # (V, E), frozen pretrained
    embedded = emb_table[inp]                         # (B, T, E) — glue gather
    B, T, _ = embedded.shape
    H = params["w_hh"].shape[0]
    V = params["w_class"].shape[1]

    vmem = pl.BlockSpec(memory_space=pltpu.MemorySpace.VMEM)  # full array in VMEM
    return pl.pallas_call(
        fused_neural_lm_kernel,
        out_shape=jax.ShapeDtypeStruct((B * T, V), jnp.float32),
        in_specs=[vmem] * 8,
        out_specs=vmem,
        scratch_shapes=[pltpu.VMEM((B, T, H), jnp.float32)],   # hidden-state buffer
    )(embedded,
      params["w_ih"], params["w_hh"], params["b_lstm"],
      params["w_dense"], params["b_dense"],
      params["w_class"], params["b_class"])


# --------------------------- pure-JAX reference ------------------------------
def neural_lm_reference(inp, params):
    emb = params["embeddings"][inp]                  # (B, T, E)
    B, T, E = emb.shape
    H = params["w_hh"].shape[0]

    def step(carry, x_t):
        h, c = carry
        gates = x_t @ params["w_ih"] + h @ params["w_hh"] + params["b_lstm"][0]
        i = jax.nn.sigmoid(gates[:, 0 * H:1 * H])
        f = jax.nn.sigmoid(gates[:, 1 * H:2 * H])
        g = jnp.tanh(gates[:, 2 * H:3 * H])
        o = jax.nn.sigmoid(gates[:, 3 * H:4 * H])
        c = f * c + i * g
        h = o * jnp.tanh(c)
        return (h, c), h

    h0 = jnp.zeros((B, H), jnp.float32)
    c0 = jnp.zeros((B, H), jnp.float32)
    (_, _), hs = jax.lax.scan(step, (h0, c0), jnp.transpose(emb, (1, 0, 2)))
    lstm_out = jnp.transpose(hs, (1, 0, 2)).reshape(-1, H)
    x = jnp.maximum(lstm_out, 0.0)
    d = jnp.maximum(x @ params["w_dense"] + params["b_dense"][0], 0.0)
    return d @ params["w_class"] + params["b_class"][0]


# --------------------------------- main --------------------------------------
if __name__ == "__main__":
    # Small, module-consistent shapes
    B, T = 2, 8
    EMB_DIM = 32
    HIDDEN = 32
    DENSE = 128
    VOCAB = 64

    key = jax.random.PRNGKey(0)
    keys = jax.random.split(key, 9)

    def u(k, shape, scale=0.1):
        return (jax.random.uniform(k, shape, jnp.float32) - 0.5) * 2.0 * scale

    params = {
        # frozen pretrained embeddings (synthetic, deterministic)
        "embeddings": u(keys[0], (VOCAB, EMB_DIM), 1.0),
        # LSTM weights stored transposed (in, 4H) / (H, 4H); gate order i,f,g,o
        "w_ih": u(keys[1], (EMB_DIM, 4 * HIDDEN)),
        "w_hh": u(keys[2], (HIDDEN, 4 * HIDDEN)),
        # combined bias = b_ih + b_hh
        "b_lstm": u(keys[3], (1, 4 * HIDDEN)),
        "w_dense": u(keys[4], (HIDDEN, DENSE)),
        "b_dense": u(keys[5], (1, DENSE)),
        "w_class": u(keys[6], (DENSE, VOCAB)),
        "b_class": u(keys[7], (1, VOCAB)),
    }

    inp = jax.random.randint(keys[8], (B, T), 0, VOCAB, dtype=jnp.int32)

    logits = neural_lm_forward(inp, params)
    logits = jax.block_until_ready(logits)

    ref = jax.block_until_ready(neural_lm_reference(inp, params))
    assert logits.shape == (B * T, VOCAB)
    assert jnp.allclose(logits, ref, atol=1e-4, rtol=1e-4), "mismatch vs reference"

    print("KERNEL_OK")
</pallas_src>

<mosaic_0001>
module attributes {stable_mosaic.version = 11 : i64} {
  func.func @fused_neural_lm_kernel(%arg0: memref<2x8x32xf32, #tpu.memory_space<vmem>>, %arg1: memref<32x128xf32, #tpu.memory_space<vmem>>, %arg2: memref<32x128xf32, #tpu.memory_space<vmem>>, %arg3: memref<1x128xf32, #tpu.memory_space<vmem>>, %arg4: memref<32x128xf32, #tpu.memory_space<vmem>>, %arg5: memref<1x128xf32, #tpu.memory_space<vmem>>, %arg6: memref<128x64xf32, #tpu.memory_space<vmem>>, %arg7: memref<1x64xf32, #tpu.memory_space<vmem>>, %arg8: memref<16x64xf32, #tpu.memory_space<vmem>>, %arg9: memref<2x8x32xf32, #tpu.memory_space<vmem>>) attributes {dimension_semantics = [], scalar_prefetch = 0 : i64, scratch_operands = 1 : i64, tpu.core_type = #tpu.core_type<tc>} {
    %c0 = arith.constant 0 : index
    %c0_0 = arith.constant 0 : index
    %c0_1 = arith.constant 0 : index
    %0 = vector.load %arg0[%c0, %c0_0, %c0_1] : memref<2x8x32xf32, #tpu.memory_space<vmem>>, vector<2x8x32xf32>
    %1 = vector.shape_cast %0 : vector<2x8x32xf32> to vector<16x32xf32>
    %c0_2 = arith.constant 0 : index
    %c0_3 = arith.constant 0 : index
    %2 = vector.load %arg1[%c0_2, %c0_3] : memref<32x128xf32, #tpu.memory_space<vmem>>, vector<32x128xf32>
    %cst = arith.constant dense<0.000000e+00> : vector<16x128xf32>
    %3 = tpu.matmul %1, %2, %cst {dimension_numbers = #tpu.dot_dimension_numbers<[1], [0], [0], [1], [0, 0, 1, 1], [], []>} : vector<16x32xf32>, vector<32x128xf32>, vector<16x128xf32> -> vector<16x128xf32>
    %c0_4 = arith.constant 0 : index
    %c0_5 = arith.constant 0 : index
    %4 = vector.load %arg3[%c0_4, %c0_5] : memref<1x128xf32, #tpu.memory_space<vmem>>, vector<1x128xf32>
    %5 = vector.broadcast %4 : vector<1x128xf32> to vector<16x128xf32>
    %6 = arith.addf %3, %5 : vector<16x128xf32>
    %7 = vector.shape_cast %6 : vector<16x128xf32> to vector<2x8x128xf32>
    %c0_6 = arith.constant 0 : index
    %c0_7 = arith.constant 0 : index
    %8 = vector.load %arg2[%c0_6, %c0_7] : memref<32x128xf32, #tpu.memory_space<vmem>>, vector<32x128xf32>
    %cst_8 = arith.constant 0.000000e+00 : f32
    %9 = vector.broadcast %cst_8 : f32 to vector<2x32xf32>
    %cst_9 = arith.constant 0.000000e+00 : f32
    %10 = vector.broadcast %cst_9 : f32 to vector<2x32xf32>
    %11 = vector.extract_strided_slice %7 {offsets = [0, 0, 0], sizes = [2, 1, 128], strides = [1, 1, 1]} : vector<2x8x128xf32> to vector<2x1x128xf32>
    %12 = vector.shape_cast %11 : vector<2x1x128xf32> to vector<2x128xf32>
    %cst_10 = arith.constant dense<0.000000e+00> : vector<2x128xf32>
    %13 = tpu.matmul %9, %8, %cst_10 {dimension_numbers = #tpu.dot_dimension_numbers<[1], [0], [0], [1], [0, 0, 1, 1], [], []>} : vector<2x32xf32>, vector<32x128xf32>, vector<2x128xf32> -> vector<2x128xf32>
    %14 = arith.addf %12, %13 : vector<2x128xf32>
    %15 = vector.extract_strided_slice %14 {offsets = [0, 0], sizes = [2, 32], strides = [1, 1]} : vector<2x128xf32> to vector<2x32xf32>
    %16 = arith.negf %15 : vector<2x32xf32>
    %17 = math.exp %16 : vector<2x32xf32>
    %cst_11 = arith.constant 1.000000e+00 : f32
    %18 = vector.broadcast %cst_11 : f32 to vector<2x32xf32>
    %19 = arith.addf %18, %17 : vector<2x32xf32>
    %20 = arith.divf %18, %19 : vector<2x32xf32>
    %21 = vector.extract_strided_slice %14 {offsets = [0, 32], sizes = [2, 32], strides = [1, 1]} : vector<2x128xf32> to vector<2x32xf32>
    %22 = arith.negf %21 : vector<2x32xf32>
    %23 = math.exp %22 : vector<2x32xf32>
    %cst_12 = arith.constant 1.000000e+00 : f32
    %24 = vector.broadcast %cst_12 : f32 to vector<2x32xf32>
    %25 = arith.addf %24, %23 : vector<2x32xf32>
    %26 = arith.divf %24, %25 : vector<2x32xf32>
    %27 = vector.extract_strided_slice %14 {offsets = [0, 64], sizes = [2, 32], strides = [1, 1]} : vector<2x128xf32> to vector<2x32xf32>
    %28 = math.tanh %27 : vector<2x32xf32>
    %29 = vector.extract_strided_slice %14 {offsets = [0, 96], sizes = [2, 32], strides = [1, 1]} : vector<2x128xf32> to vector<2x32xf32>
    %30 = arith.negf %29 : vector<2x32xf32>
    %31 = math.exp %30 : vector<2x32xf32>
    %cst_13 = arith.constant 1.000000e+00 : f32
    %32 = vector.broadcast %cst_13 : f32 to vector<2x32xf32>
    %33 = arith.addf %32, %31 : vector<2x32xf32>
    %34 = arith.divf %32, %33 : vector<2x32xf32>
    %35 = arith.mulf %26, %10 : vector<2x32xf32>
    %36 = arith.mulf %20, %28 : vector<2x32xf32>
    %37 = arith.addf %35, %36 : vector<2x32xf32>
    %38 = math.tanh %37 : vector<2x32xf32>
    %39 = arith.mulf %34, %38 : vector<2x32xf32>
    %c0_14 = arith.constant 0 : index
    %c0_15 = arith.constant 0 : index
    %c0_16 = arith.constant 0 : index
    %40 = vector.load %arg9[%c0_14, %c0_15, %c0_16] : memref<2x8x32xf32, #tpu.memory_space<vmem>>, vector<2x1x32xf32>
    %41 = vector.shape_cast %40 : vector<2x1x32xf32> to vector<2x32xf32>
    %42 = vector.shape_cast %39 : vector<2x32xf32> to vector<2x1x32xf32>
    tpu.vector_store %arg9[%c0_14, %c0_15, %c0_16], %42 {strides = array<i32>} : memref<2x8x32xf32, #tpu.memory_space<vmem>>, vector<2x1x32xf32>,
    %43 = vector.extract_strided_slice %7 {offsets = [0, 1, 0], sizes = [2, 1, 128], strides = [1, 1, 1]} : vector<2x8x128xf32> to vector<2x1x128xf32>
    %44 = vector.shape_cast %43 : vector<2x1x128xf32> to vector<2x128xf32>
    %cst_17 = arith.constant dense<0.000000e+00> : vector<2x128xf32>
    %45 = tpu.matmul %39, %8, %cst_17 {dimension_numbers = #tpu.dot_dimension_numbers<[1], [0], [0], [1], [0, 0, 1, 1], [], []>} : vector<2x32xf32>, vector<32x128xf32>, vector<2x128xf32> -> vector<2x128xf32>
    %46 = arith.addf %44, %45 : vector<2x128xf32>
    %47 = vector.extract_strided_slice %46 {offsets = [0, 0], sizes = [2, 32], strides = [1, 1]} : vector<2x128xf32> to vector<2x32xf32>
    %48 = arith.negf %47 : vector<2x32xf32>
    %49 = math.exp %48 : vector<2x32xf32>
    %cst_18 = arith.constant 1.000000e+00 : f32
    %50 = vector.broadcast %cst_18 : f32 to vector<2x32xf32>
    %51 = arith.addf %50, %49 : vector<2x32xf32>
    %52 = arith.divf %50, %51 : vector<2x32xf32>
    %53 = vector.extract_strided_slice %46 {offsets = [0, 32], sizes = [2, 32], strides = [1, 1]} : vector<2x128xf32> to vector<2x32xf32>
    %54 = arith.negf %53 : vector<2x32xf32>
    %55 = math.exp %54 : vector<2x32xf32>
    %cst_19 = arith.constant 1.000000e+00 : f32
    %56 = vector.broadcast %cst_19 : f32 to vector<2x32xf32>
    %57 = arith.addf %56, %55 : vector<2x32xf32>
    %58 = arith.divf %56, %57 : vector<2x32xf32>
    %59 = vector.extract_strided_slice %46 {offsets = [0, 64], sizes = [2, 32], strides = [1, 1]} : vector<2x128xf32> to vector<2x32xf32>
    %60 = math.tanh %59 : vector<2x32xf32>
    %61 = vector.extract_strided_slice %46 {offsets = [0, 96], sizes = [2, 32], strides = [1, 1]} : vector<2x128xf32> to vector<2x32xf32>
    %62 = arith.negf %61 : vector<2x32xf32>
    %63 = math.exp %62 : vector<2x32xf32>
    %cst_20 = arith.constant 1.000000e+00 : f32
    %64 = vector.broadcast %cst_20 : f32 to vector<2x32xf32>
    %65 = arith.addf %64, %63 : vector<2x32xf32>
    %66 = arith.divf %64, %65 : vector<2x32xf32>
    %67 = arith.mulf %58, %37 : vector<2x32xf32>
    %68 = arith.mulf %52, %60 : vector<2x32xf32>
    %69 = arith.addf %67, %68 : vector<2x32xf32>
    %70 = math.tanh %69 : vector<2x32xf32>
    %71 = arith.mulf %66, %70 : vector<2x32xf32>
    %c0_21 = arith.constant 0 : index
    %c1 = arith.constant 1 : index
    %c0_22 = arith.constant 0 : index
    %72 = vector.load %arg9[%c0_21, %c1, %c0_22] : memref<2x8x32xf32, #tpu.memory_space<vmem>>, vector<2x1x32xf32>
    %73 = vector.shape_cast %72 : vector<2x1x32xf32> to vector<2x32xf32>
    %74 = vector.shape_cast %71 : vector<2x32xf32> to vector<2x1x32xf32>
    tpu.vector_store %arg9[%c0_21, %c1, %c0_22], %74 {strides = array<i32>} : memref<2x8x32xf32, #tpu.memory_space<vmem>>, vector<2x1x32xf32>,
    %75 = vector.extract_strided_slice %7 {offsets = [0, 2, 0], sizes = [2, 1, 128], strides = [1, 1, 1]} : vector<2x8x128xf32> to vector<2x1x128xf32>
    %76 = vector.shape_cast %75 : vector<2x1x128xf32> to vector<2x128xf32>
    %cst_23 = arith.constant dense<0.000000e+00> : vector<2x128xf32>
    %77 = tpu.matmul %71, %8, %cst_23 {dimension_numbers = #tpu.dot_dimension_numbers<[1], [0], [0], [1], [0, 0, 1, 1], [], []>} : vector<2x32xf32>, vector<32x128xf32>, vector<2x128xf32> -> vector<2x128xf32>
    %78 = arith.addf %76, %77 : vector<2x128xf32>
    %79 = vector.extract_strided_slice %78 {offsets = [0, 0], sizes = [2, 32], strides = [1, 1]} : vector<2x128xf32> to vector<2x32xf32>
    %80 = arith.negf %79 : vector<2x32xf32>
    %81 = math.exp %80 : vector<2x32xf32>
    %cst_24 = arith.constant 1.000000e+00 : f32
    %82 = vector.broadcast %cst_24 : f32 to vector<2x32xf32>
    %83 = arith.addf %82, %81 : vector<2x32xf32>
    %84 = arith.divf %82, %83 : vector<2x32xf32>
    %85 = vector.extract_strided_slice %78 {offsets = [0, 32], sizes = [2, 32], strides = [1, 1]} : vector<2x128xf32> to vector<2x32xf32>
    %86 = arith.negf %85 : vector<2x32xf32>
    %87 = math.exp %86 : vector<2x32xf32>
    %cst_25 = arith.constant 1.000000e+00 : f32
    %88 = vector.broadcast %cst_25 : f32 to vector<2x32xf32>
    %89 = arith.addf %88, %87 : vector<2x32xf32>
    %90 = arith.divf %88, %89 : vector<2x32xf32>
    %91 = vector.extract_strided_slice %78 {offsets = [0, 64], sizes = [2, 32], strides = [1, 1]} : vector<2x128xf32> to vector<2x32xf32>
    %92 = math.tanh %91 : vector<2x32xf32>
    %93 = vector.extract_strided_slice %78 {offsets = [0, 96], sizes = [2, 32], strides = [1, 1]} : vector<2x128xf32> to vector<2x32xf32>
    %94 = arith.negf %93 : vector<2x32xf32>
    %95 = math.exp %94 : vector<2x32xf32>
    %cst_26 = arith.constant 1.000000e+00 : f32
    %96 = vector.broadcast %cst_26 : f32 to vector<2x32xf32>
    %97 = arith.addf %96, %95 : vector<2x32xf32>
    %98 = arith.divf %96, %97 : vector<2x32xf32>
    %99 = arith.mulf %90, %69 : vector<2x32xf32>
    %100 = arith.mulf %84, %92 : vector<2x32xf32>
    %101 = arith.addf %99, %100 : vector<2x32xf32>
    %102 = math.tanh %101 : vector<2x32xf32>
    %103 = arith.mulf %98, %102 : vector<2x32xf32>
    %c0_27 = arith.constant 0 : index
    %c2 = arith.constant 2 : index
    %c0_28 = arith.constant 0 : index
    %104 = vector.load %arg9[%c0_27, %c2, %c0_28] : memref<2x8x32xf32, #tpu.memory_space<vmem>>, vector<2x1x32xf32>
    %105 = vector.shape_cast %104 : vector<2x1x32xf32> to vector<2x32xf32>
    %106 = vector.shape_cast %103 : vector<2x32xf32> to vector<2x1x32xf32>
    tpu.vector_store %arg9[%c0_27, %c2, %c0_28], %106 {strides = array<i32>} : memref<2x8x32xf32, #tpu.memory_space<vmem>>, vector<2x1x32xf32>,
    %107 = vector.extract_strided_slice %7 {offsets = [0, 3, 0], sizes = [2, 1, 128], strides = [1, 1, 1]} : vector<2x8x128xf32> to vector<2x1x128xf32>
    %108 = vector.shape_cast %107 : vector<2x1x128xf32> to vector<2x128xf32>
    %cst_29 = arith.constant dense<0.000000e+00> : vector<2x128xf32>
    %109 = tpu.matmul %103, %8, %cst_29 {dimension_numbers = #tpu.dot_dimension_numbers<[1], [0], [0], [1], [0, 0, 1, 1], [], []>} : vector<2x32xf32>, vector<32x128xf32>, vector<2x128xf32> -> vector<2x128xf32>
    %110 = arith.addf %108, %109 : vector<2x128xf32>
    %111 = vector.extract_strided_slice %110 {offsets = [0, 0], sizes = [2, 32], strides = [1, 1]} : vector<2x128xf32> to vector<2x32xf32>
    %112 = arith.negf %111 : vector<2x32xf32>
    %113 = math.exp %112 : vector<2x32xf32>
    %cst_30 = arith.constant 1.000000e+00 : f32
    %114 = vector.broadcast %cst_30 : f32 to vector<2x32xf32>
    %115 = arith.addf %114, %113 : vector<2x32xf32>
    %116 = arith.divf %114, %115 : vector<2x32xf32>
    %117 = vector.extract_strided_slice %110 {offsets = [0, 32], sizes = [2, 32], strides = [1, 1]} : vector<2x128xf32> to vector<2x32xf32>
    %118 = arith.negf %117 : vector<2x32xf32>
    %119 = math.exp %118 : vector<2x32xf32>
    %cst_31 = arith.constant 1.000000e+00 : f32
    %120 = vector.broadcast %cst_31 : f32 to vector<2x32xf32>
    %121 = arith.addf %120, %119 : vector<2x32xf32>
    %122 = arith.divf %120, %121 : vector<2x32xf32>
    %123 = vector.extract_strided_slice %110 {offsets = [0, 64], sizes = [2, 32], strides = [1, 1]} : vector<2x128xf32> to vector<2x32xf32>
    %124 = math.tanh %123 : vector<2x32xf32>
    %125 = vector.extract_strided_slice %110 {offsets = [0, 96], sizes = [2, 32], strides = [1, 1]} : vector<2x128xf32> to vector<2x32xf32>
    %126 = arith.negf %125 : vector<2x32xf32>
    %127 = math.exp %126 : vector<2x32xf32>
    %cst_32 = arith.constant 1.000000e+00 : f32
    %128 = vector.broadcast %cst_32 : f32 to vector<2x32xf32>
    %129 = arith.addf %128, %127 : vector<2x32xf32>
    %130 = arith.divf %128, %129 : vector<2x32xf32>
    %131 = arith.mulf %122, %101 : vector<2x32xf32>
    %132 = arith.mulf %116, %124 : vector<2x32xf32>
    %133 = arith.addf %131, %132 : vector<2x32xf32>
    %134 = math.tanh %133 : vector<2x32xf32>
    %135 = arith.mulf %130, %134 : vector<2x32xf32>
    %c0_33 = arith.constant 0 : index
    %c3 = arith.constant 3 : index
    %c0_34 = arith.constant 0 : index
    %136 = vector.load %arg9[%c0_33, %c3, %c0_34] : memref<2x8x32xf32, #tpu.memory_space<vmem>>, vector<2x1x32xf32>
    %137 = vector.shape_cast %136 : vector<2x1x32xf32> to vector<2x32xf32>
    %138 = vector.shape_cast %135 : vector<2x32xf32> to vector<2x1x32xf32>
    tpu.vector_store %arg9[%c0_33, %c3, %c0_34], %138 {strides = array<i32>} : memref<2x8x32xf32, #tpu.memory_space<vmem>>, vector<2x1x32xf32>,
    %139 = vector.extract_strided_slice %7 {offsets = [0, 4, 0], sizes = [2, 1, 128], strides = [1, 1, 1]} : vector<2x8x128xf32> to vector<2x1x128xf32>
    %140 = vector.shape_cast %139 : vector<2x1x128xf32> to vector<2x128xf32>
    %cst_35 = arith.constant dense<0.000000e+00> : vector<2x128xf32>
    %141 = tpu.matmul %135, %8, %cst_35 {dimension_numbers = #tpu.dot_dimension_numbers<[1], [0], [0], [1], [0, 0, 1, 1], [], []>} : vector<2x32xf32>, vector<32x128xf32>, vector<2x128xf32> -> vector<2x128xf32>
    %142 = arith.addf %140, %141 : vector<2x128xf32>
    %143 = vector.extract_strided_slice %142 {offsets = [0, 0], sizes = [2, 32], strides = [1, 1]} : vector<2x128xf32> to vector<2x32xf32>
    %144 = arith.negf %143 : vector<2x32xf32>
    %145 = math.exp %144 : vector<2x32xf32>
    %cst_36 = arith.constant 1.000000e+00 : f32
    %146 = vector.broadcast %cst_36 : f32 to vector<2x32xf32>
    %147 = arith.addf %146, %145 : vector<2x32xf32>
    %148 = arith.divf %146, %147 : vector<2x32xf32>
    %149 = vector.extract_strided_slice %142 {offsets = [0, 32], sizes = [2, 32], strides = [1, 1]} : vector<2x128xf32> to vector<2x32xf32>
    %150 = arith.negf %149 : vector<2x32xf32>
    %151 = math.exp %150 : vector<2x32xf32>
    %cst_37 = arith.constant 1.000000e+00 : f32
    %152 = vector.broadcast %cst_37 : f32 to vector<2x32xf32>
    %153 = arith.addf %152, %151 : vector<2x32xf32>
    %154 = arith.divf %152, %153 : vector<2x32xf32>
    %155 = vector.extract_strided_slice %142 {offsets = [0, 64], sizes = [2, 32], strides = [1, 1]} : vector<2x128xf32> to vector<2x32xf32>
    %156 = math.tanh %155 : vector<2x32xf32>
    %157 = vector.extract_strided_slice %142 {offsets = [0, 96], sizes = [2, 32], strides = [1, 1]} : vector<2x128xf32> to vector<2x32xf32>
    %158 = arith.negf %157 : vector<2x32xf32>
    %159 = math.exp %158 : vector<2x32xf32>
    %cst_38 = arith.constant 1.000000e+00 : f32
    %160 = vector.broadcast %cst_38 : f32 to vector<2x32xf32>
    %161 = arith.addf %160, %159 : vector<2x32xf32>
    %162 = arith.divf %160, %161 : vector<2x32xf32>
    %163 = arith.mulf %154, %133 : vector<2x32xf32>
    %164 = arith.mulf %148, %156 : vector<2x32xf32>
    %165 = arith.addf %163, %164 : vector<2x32xf32>
    %166 = math.tanh %165 : vector<2x32xf32>
    %167 = arith.mulf %162, %166 : vector<2x32xf32>
    %c0_39 = arith.constant 0 : index
    %c4 = arith.constant 4 : index
    %c0_40 = arith.constant 0 : index
    %168 = vector.load %arg9[%c0_39, %c4, %c0_40] : memref<2x8x32xf32, #tpu.memory_space<vmem>>, vector<2x1x32xf32>
    %169 = vector.shape_cast %168 : vector<2x1x32xf32> to vector<2x32xf32>
    %170 = vector.shape_cast %167 : vector<2x32xf32> to vector<2x1x32xf32>
    tpu.vector_store %arg9[%c0_39, %c4, %c0_40], %170 {strides = array<i32>} : memref<2x8x32xf32, #tpu.memory_space<vmem>>, vector<2x1x32xf32>,
    %171 = vector.extract_strided_slice %7 {offsets = [0, 5, 0], sizes = [2, 1, 128], strides = [1, 1, 1]} : vector<2x8x128xf32> to vector<2x1x128xf32>
    %172 = vector.shape_cast %171 : vector<2x1x128xf32> to vector<2x128xf32>
    %cst_41 = arith.constant dense<0.000000e+00> : vector<2x128xf32>
    %173 = tpu.matmul %167, %8, %cst_41 {dimension_numbers = #tpu.dot_dimension_numbers<[1], [0], [0], [1], [0, 0, 1, 1], [], []>} : vector<2x32xf32>, vector<32x128xf32>, vector<2x128xf32> -> vector<2x128xf32>
    %174 = arith.addf %172, %173 : vector<2x128xf32>
    %175 = vector.extract_strided_slice %174 {offsets = [0, 0], sizes = [2, 32], strides = [1, 1]} : vector<2x128xf32> to vector<2x32xf32>
    %176 = arith.negf %175 : vector<2x32xf32>
    %177 = math.exp %176 : vector<2x32xf32>
    %cst_42 = arith.constant 1.000000e+00 : f32
    %178 = vector.broadcast %cst_42 : f32 to vector<2x32xf32>
    %179 = arith.addf %178, %177 : vector<2x32xf32>
    %180 = arith.divf %178, %179 : vector<2x32xf32>
    %181 = vector.extract_strided_slice %174 {offsets = [0, 32], sizes = [2, 32], strides = [1, 1]} : vector<2x128xf32> to vector<2x32xf32>
    %182 = arith.negf %181 : vector<2x32xf32>
    %183 = math.exp %182 : vector<2x32xf32>
    %cst_43 = arith.constant 1.000000e+00 : f32
    %184 = vector.broadcast %cst_43 : f32 to vector<2x32xf32>
    %185 = arith.addf %184, %183 : vector<2x32xf32>
    %186 = arith.divf %184, %185 : vector<2x32xf32>
    %187 = vector.extract_strided_slice %174 {offsets = [0, 64], sizes = [2, 32], strides = [1, 1]} : vector<2x128xf32> to vector<2x32xf32>
    %188 = math.tanh %187 : vector<2x32xf32>
    %189 = vector.extract_strided_slice %174 {offsets = [0, 96], sizes = [2, 32], strides = [1, 1]} : vector<2x128xf32> to vector<2x32xf32>
    %190 = arith.negf %189 : vector<2x32xf32>
    %191 = math.exp %190 : vector<2x32xf32>
    %cst_44 = arith.constant 1.000000e+00 : f32
    %192 = vector.broadcast %cst_44 : f32 to vector<2x32xf32>
    %193 = arith.addf %192, %191 : vector<2x32xf32>
    %194 = arith.divf %192, %193 : vector<2x32xf32>
    %195 = arith.mulf %186, %165 : vector<2x32xf32>
    %196 = arith.mulf %180, %188 : vector<2x32xf32>
    %197 = arith.addf %195, %196 : vector<2x32xf32>
    %198 = math.tanh %197 : vector<2x32xf32>
    %199 = arith.mulf %194, %198 : vector<2x32xf32>
    %c0_45 = arith.constant 0 : index
    %c5 = arith.constant 5 : index
    %c0_46 = arith.constant 0 : index
    %200 = vector.load %arg9[%c0_45, %c5, %c0_46] : memref<2x8x32xf32, #tpu.memory_space<vmem>>, vector<2x1x32xf32>
    %201 = vector.shape_cast %200 : vector<2x1x32xf32> to vector<2x32xf32>
    %202 = vector.shape_cast %199 : vector<2x32xf32> to vector<2x1x32xf32>
    tpu.vector_store %arg9[%c0_45, %c5, %c0_46], %202 {strides = array<i32>} : memref<2x8x32xf32, #tpu.memory_space<vmem>>, vector<2x1x32xf32>,
    %203 = vector.extract_strided_slice %7 {offsets = [0, 6, 0], sizes = [2, 1, 128], strides = [1, 1, 1]} : vector<2x8x128xf32> to vector<2x1x128xf32>
    %204 = vector.shape_cast %203 : vector<2x1x128xf32> to vector<2x128xf32>
    %cst_47 = arith.constant dense<0.000000e+00> : vector<2x128xf32>
    %205 = tpu.matmul %199, %8, %cst_47 {dimension_numbers = #tpu.dot_dimension_numbers<[1], [0], [0], [1], [0, 0, 1, 1], [], []>} : vector<2x32xf32>, vector<32x128xf32>, vector<2x128xf32> -> vector<2x128xf32>
    %206 = arith.addf %204, %205 : vector<2x128xf32>
    %207 = vector.extract_strided_slice %206 {offsets = [0, 0], sizes = [2, 32], strides = [1, 1]} : vector<2x128xf32> to vector<2x32xf32>
    %208 = arith.negf %207 : vector<2x32xf32>
    %209 = math.exp %208 : vector<2x32xf32>
    %cst_48 = arith.constant 1.000000e+00 : f32
    %210 = vector.broadcast %cst_48 : f32 to vector<2x32xf32>
    %211 = arith.addf %210, %209 : vector<2x32xf32>
    %212 = arith.divf %210, %211 : vector<2x32xf32>
    %213 = vector.extract_strided_slice %206 {offsets = [0, 32], sizes = [2, 32], strides = [1, 1]} : vector<2x128xf32> to vector<2x32xf32>
    %214 = arith.negf %213 : vector<2x32xf32>
    %215 = math.exp %214 : vector<2x32xf32>
    %cst_49 = arith.constant 1.000000e+00 : f32
    %216 = vector.broadcast %cst_49 : f32 to vector<2x32xf32>
    %217 = arith.addf %216, %215 : vector<2x32xf32>
    %218 = arith.divf %216, %217 : vector<2x32xf32>
    %219 = vector.extract_strided_slice %206 {offsets = [0, 64], sizes = [2, 32], strides = [1, 1]} : vector<2x128xf32> to vector<2x32xf32>
    %220 = math.tanh %219 : vector<2x32xf32>
    %221 = vector.extract_strided_slice %206 {offsets = [0, 96], sizes = [2, 32], strides = [1, 1]} : vector<2x128xf32> to vector<2x32xf32>
    %222 = arith.negf %221 : vector<2x32xf32>
    %223 = math.exp %222 : vector<2x32xf32>
    %cst_50 = arith.constant 1.000000e+00 : f32
    %224 = vector.broadcast %cst_50 : f32 to vector<2x32xf32>
    %225 = arith.addf %224, %223 : vector<2x32xf32>
    %226 = arith.divf %224, %225 : vector<2x32xf32>
    %227 = arith.mulf %218, %197 : vector<2x32xf32>
    %228 = arith.mulf %212, %220 : vector<2x32xf32>
    %229 = arith.addf %227, %228 : vector<2x32xf32>
    %230 = math.tanh %229 : vector<2x32xf32>
    %231 = arith.mulf %226, %230 : vector<2x32xf32>
    %c0_51 = arith.constant 0 : index
    %c6 = arith.constant 6 : index
    %c0_52 = arith.constant 0 : index
    %232 = vector.load %arg9[%c0_51, %c6, %c0_52] : memref<2x8x32xf32, #tpu.memory_space<vmem>>, vector<2x1x32xf32>
    %233 = vector.shape_cast %232 : vector<2x1x32xf32> to vector<2x32xf32>
    %234 = vector.shape_cast %231 : vector<2x32xf32> to vector<2x1x32xf32>
    tpu.vector_store %arg9[%c0_51, %c6, %c0_52], %234 {strides = array<i32>} : memref<2x8x32xf32, #tpu.memory_space<vmem>>, vector<2x1x32xf32>,
    %235 = vector.extract_strided_slice %7 {offsets = [0, 7, 0], sizes = [2, 1, 128], strides = [1, 1, 1]} : vector<2x8x128xf32> to vector<2x1x128xf32>
    %236 = vector.shape_cast %235 : vector<2x1x128xf32> to vector<2x128xf32>
    %cst_53 = arith.constant dense<0.000000e+00> : vector<2x128xf32>
    %237 = tpu.matmul %231, %8, %cst_53 {dimension_numbers = #tpu.dot_dimension_numbers<[1], [0], [0], [1], [0, 0, 1, 1], [], []>} : vector<2x32xf32>, vector<32x128xf32>, vector<2x128xf32> -> vector<2x128xf32>
    %238 = arith.addf %236, %237 : vector<2x128xf32>
    %239 = vector.extract_strided_slice %238 {offsets = [0, 0], sizes = [2, 32], strides = [1, 1]} : vector<2x128xf32> to vector<2x32xf32>
    %240 = arith.negf %239 : vector<2x32xf32>
    %241 = math.exp %240 : vector<2x32xf32>
    %cst_54 = arith.constant 1.000000e+00 : f32
    %242 = vector.broadcast %cst_54 : f32 to vector<2x32xf32>
    %243 = arith.addf %242, %241 : vector<2x32xf32>
    %244 = arith.divf %242, %243 : vector<2x32xf32>
    %245 = vector.extract_strided_slice %238 {offsets = [0, 32], sizes = [2, 32], strides = [1, 1]} : vector<2x128xf32> to vector<2x32xf32>
    %246 = arith.negf %245 : vector<2x32xf32>
    %247 = math.exp %246 : vector<2x32xf32>
    %cst_55 = arith.constant 1.000000e+00 : f32
    %248 = vector.broadcast %cst_55 : f32 to vector<2x32xf32>
    %249 = arith.addf %248, %247 : vector<2x32xf32>
    %250 = arith.divf %248, %249 : vector<2x32xf32>
    %251 = vector.extract_strided_slice %238 {offsets = [0, 64], sizes = [2, 32], strides = [1, 1]} : vector<2x128xf32> to vector<2x32xf32>
    %252 = math.tanh %251 : vector<2x32xf32>
    %253 = vector.extract_strided_slice %238 {offsets = [0, 96], sizes = [2, 32], strides = [1, 1]} : vector<2x128xf32> to vector<2x32xf32>
    %254 = arith.negf %253 : vector<2x32xf32>
    %255 = math.exp %254 : vector<2x32xf32>
    %cst_56 = arith.constant 1.000000e+00 : f32
    %256 = vector.broadcast %cst_56 : f32 to vector<2x32xf32>
    %257 = arith.addf %256, %255 : vector<2x32xf32>
    %258 = arith.divf %256, %257 : vector<2x32xf32>
    %259 = arith.mulf %250, %229 : vector<2x32xf32>
    %260 = arith.mulf %244, %252 : vector<2x32xf32>
    %261 = arith.addf %259, %260 : vector<2x32xf32>
    %262 = math.tanh %261 : vector<2x32xf32>
    %263 = arith.mulf %258, %262 : vector<2x32xf32>
    %c0_57 = arith.constant 0 : index
    %c7 = arith.constant 7 : index
    %c0_58 = arith.constant 0 : index
    %264 = vector.load %arg9[%c0_57, %c7, %c0_58] : memref<2x8x32xf32, #tpu.memory_space<vmem>>, vector<2x1x32xf32>
    %265 = vector.shape_cast %264 : vector<2x1x32xf32> to vector<2x32xf32>
    %266 = vector.shape_cast %263 : vector<2x32xf32> to vector<2x1x32xf32>
    tpu.vector_store %arg9[%c0_57, %c7, %c0_58], %266 {strides = array<i32>} : memref<2x8x32xf32, #tpu.memory_space<vmem>>, vector<2x1x32xf32>,
    %c0_59 = arith.constant 0 : index
    %c0_60 = arith.constant 0 : index
    %c0_61 = arith.constant 0 : index
    %267 = vector.load %arg9[%c0_59, %c0_60, %c0_61] : memref<2x8x32xf32, #tpu.memory_space<vmem>>, vector<2x8x32xf32>
    %268 = vector.shape_cast %267 : vector<2x8x32xf32> to vector<16x32xf32>
    %cst_62 = arith.constant 0.000000e+00 : f32
    %269 = vector.broadcast %cst_62 : f32 to vector<16x32xf32>
    %270 = arith.maximumf %268, %269 : vector<16x32xf32>
    %c0_63 = arith.constant 0 : index
    %c0_64 = arith.constant 0 : index
    %271 = vector.load %arg4[%c0_63, %c0_64] : memref<32x128xf32, #tpu.memory_space<vmem>>, vector<32x128xf32>
    %cst_65 = arith.constant dense<0.000000e+00> : vector<16x128xf32>
    %272 = tpu.matmul %270, %271, %cst_65 {dimension_numbers = #tpu.dot_dimension_numbers<[1], [0], [0], [1], [0, 0, 1, 1], [], []>} : vector<16x32xf32>, vector<32x128xf32>, vector<16x128xf32> -> vector<16x128xf32>
    %c0_66 = arith.constant 0 : index
    %c0_67 = arith.constant 0 : index
    %273 = vector.load %arg5[%c0_66, %c0_67] : memref<1x128xf32, #tpu.memory_space<vmem>>, vector<1x128xf32>
    %274 = vector.broadcast %273 : vector<1x128xf32> to vector<16x128xf32>
    %275 = arith.addf %272, %274 : vector<16x128xf32>
    %cst_68 = arith.constant 0.000000e+00 : f32
    %276 = vector.broadcast %cst_68 : f32 to vector<16x128xf32>
    %277 = arith.maximumf %275, %276 : vector<16x128xf32>
    %c0_69 = arith.constant 0 : index
    %c0_70 = arith.constant 0 : index
    %278 = vector.load %arg6[%c0_69, %c0_70] : memref<128x64xf32, #tpu.memory_space<vmem>>, vector<128x64xf32>
    %cst_71 = arith.constant dense<0.000000e+00> : vector<16x64xf32>
    %279 = tpu.matmul %277, %278, %cst_71 {dimension_numbers = #tpu.dot_dimension_numbers<[1], [0], [0], [1], [0, 0, 1, 1], [], []>} : vector<16x128xf32>, vector<128x64xf32>, vector<16x64xf32> -> vector<16x64xf32>
    %c0_72 = arith.constant 0 : index
    %c0_73 = arith.constant 0 : index
    %280 = vector.load %arg7[%c0_72, %c0_73] : memref<1x64xf32, #tpu.memory_space<vmem>>, vector<1x64xf32>
    %281 = vector.broadcast %280 : vector<1x64xf32> to vector<16x64xf32>
    %282 = arith.addf %279, %281 : vector<16x64xf32>
    %c0_74 = arith.constant 0 : index
    %c0_75 = arith.constant 0 : index
    %283 = vector.load %arg8[%c0_74, %c0_75] : memref<16x64xf32, #tpu.memory_space<vmem>>, vector<16x64xf32>
    tpu.vector_store %arg8[%c0_74, %c0_75], %282 {strides = array<i32>} : memref<16x64xf32, #tpu.memory_space<vmem>>, vector<16x64xf32>,
    return
  }
}

</mosaic_0001>

<llo_original>
// kernel: tpu_custom_call.1
$region0: #{tpu_custom_call.1}
  #allocation0 [shape = 'u32[]', space=smem, size = 0x4, offset = 0x4, fixed_abs, tag = 'smem constant byte address 0x4 - core index']
  #allocation1 [shape = 'u32[72,128]{1,0:T(1,128)}', space=vmem, size = 0x9000, scoped, tag = 'internal scratch']
  #allocation2 [shape = 'f32[2,8,32]{2,1,0:T(8,128)}', space=vmem, size = 0x2000, scoped, tag = 'scratch operand']
  %s0 = inlined_call_operand.vmem [shape: f32[2,8,32], index: 0, kind: input, shape index: {}]
  %s1 = inlined_call_operand.vmem [shape: f32[32,128], index: 1, kind: input, shape index: {}]
  %s2 = inlined_call_operand.vmem [shape: f32[32,128], index: 2, kind: input, shape index: {}]
  %s3 = inlined_call_operand.vmem [shape: f32[1,128], index: 3, kind: input, shape index: {}]
  %s4 = inlined_call_operand.vmem [shape: f32[32,128], index: 4, kind: input, shape index: {}]
  %s5 = inlined_call_operand.vmem [shape: f32[1,128], index: 5, kind: input, shape index: {}]
  %s6 = inlined_call_operand.vmem [shape: f32[128,64], index: 6, kind: input, shape index: {}]
  %s7 = inlined_call_operand.vmem [shape: f32[1,64], index: 7, kind: input, shape index: {}]
  %s8 = inlined_call_operand.hbm [shape: f32[16,64], index: 8, kind: output, shape index: {}]
  %s9 = sld [smem:[#allocation0]]
  $region42: #{tpu_custom_call.1} parent=0
    _
  %s11 = ssub.s32 1, %s9
  %s12 = scalar_select 0, %s11, %s9
  $region1: #{tpu_custom_call.1} parent=0
    #allocation3 [shape = 'u8[8192]{0}', space=vmem, size = 0x2000, scoped, tag = 'output window, operand 0, single buffered']
    #allocation4 [shape = 's32[1]{0}', space=sflag, size = 0x4, scoped, tag = 'scoped memory for tpu_custom_call.1']
    %13 = vsyncpa [#allocation4], 0
    // Predicated region
    $region2: #{tpu_custom_call.1} parent=1 // pred_check
      _
    $region3: #{tpu_custom_call.1} parent=1 // pred_check_branch
      %15 = sbr.rel (0) target = $region5
    $region4: #{tpu_custom_call.1} parent=1 // pred_region
      _
    $region5: #{tpu_custom_call.1} parent=1 // pred_fallthru
      _
    // Predicated region
    $region6: #{tpu_custom_call.1} parent=1 // pred_check
      _
    $region7: #{tpu_custom_call.1} parent=1 // pred_check_branch
      %17 = sbr.rel (0) target = $region9
    $region8: #{tpu_custom_call.1} parent=1 // pred_region
      _
    $region9: #{tpu_custom_call.1} parent=1 // pred_fallthru
      _
    // Predicated region
    $region10: #{tpu_custom_call.1} parent=1 // pred_check
      _
    $region11: #{tpu_custom_call.1} parent=1 // pred_check_branch
      %19 = sbr.rel (0) target = $region13
    $region12: #{tpu_custom_call.1} parent=1 // pred_region
      _
    $region13: #{tpu_custom_call.1} parent=1 // pred_fallthru
      _
    // Predicated region
    $region14: #{tpu_custom_call.1} parent=1 // pred_check
      _
    $region15: #{tpu_custom_call.1} parent=1 // pred_check_branch
      %21 = sbr.rel (0) target = $region17
    $region16: #{tpu_custom_call.1} parent=1 // pred_region
      _
    $region17: #{tpu_custom_call.1} parent=1 // pred_fallthru
      _
    // Predicated region
    $region18: #{tpu_custom_call.1} parent=1 // pred_check
      _
    $region19: #{tpu_custom_call.1} parent=1 // pred_check_branch
      %23 = sbr.rel (0) target = $region21
    $region20: #{tpu_custom_call.1} parent=1 // pred_region
      _
    $region21: #{tpu_custom_call.1} parent=1 // pred_fallthru
      _
    // Predicated region
    $region22: #{tpu_custom_call.1} parent=1 // pred_check
      _
    $region23: #{tpu_custom_call.1} parent=1 // pred_check_branch
      %25 = sbr.rel (0) target = $region25
    $region24: #{tpu_custom_call.1} parent=1 // pred_region
      _
    $region25: #{tpu_custom_call.1} parent=1 // pred_fallthru
      _
    // Predicated region
    $region26: #{tpu_custom_call.1} parent=1 // pred_check
      _
    $region27: #{tpu_custom_call.1} parent=1 // pred_check_branch
      %27 = sbr.rel (0) target = $region29
    $region28: #{tpu_custom_call.1} parent=1 // pred_region
      _
    $region29: #{tpu_custom_call.1} parent=1 // pred_fallthru
      _
    // Predicated region
    $region30: #{tpu_custom_call.1} parent=1 // pred_check
      _
    $region31: #{tpu_custom_call.1} parent=1 // pred_check_branch
      %29 = sbr.rel (0) target = $region33
    $region32: #{tpu_custom_call.1} parent=1 // pred_region
      _
    $region33: #{tpu_custom_call.1} parent=1 // pred_fallthru
      _
    %v30 = vld [vmem:[%s0] sm:$0xff]
    %v31 = vld [vmem:[%s0 + $0x8] sm:$0xff]
    %v32 = vld [vmem:[%s1] sm:$0xff]
    %v33 = vld [vmem:[%s1 + $0x8] sm:$0xff]
    %v34 = vld [vmem:[%s1 + $0x10] sm:$0xff]
    %v35 = vld [vmem:[%s1 + $0x18] sm:$0xff]
    %v36 = vld [vmem:[%s3] sm:$0x1]
    %v38 = vperm.slane %v36, 0
    %vm40 = vcmask 261120
    %v42 = vsel %vm40, %v30, 0
    %v45 = vsel %vm40, %v31, 0
    %47 = vmatpush.msra.mxu0 0.0
    %48 = vmatpush.msra.mxu0 0.0
    %49 = vmatpush.msra.mxu0 0.0
    %50 = vmatpush.msra.mxu0 0.0
    %51 = vmatpush.msra.mxu0 0.0
    %52 = vmatpush.msra.mxu0 0.0
    %53 = vmatpush.msra.mxu0 0.0
    %54 = vmatpush.msra.mxu0 0.0
    %55 = vmatpush.msra.mxu0 0.0
    %56 = vmatpush.msra.mxu0 0.0
    %57 = vmatpush.msra.mxu0 0.0
    %58 = vmatpush.msra.mxu0 0.0
    %59 = vmatpush.msra.mxu0 %v35
    %60 = vmatpush.msra.mxu0 %v34
    %61 = vmatpush.msra.mxu0 %v33
    %62 = vmatpush.msra.mxu0 %v32
    %63 = vmatmul.f32.gmra.mxu0 %v42
    %v64 = vpop.f32.mrf.mxu0
    %v65 = vadd.f32 %v38, %v64
    %66 = vmatmul.f32.gmra.mxu0 %v45
    %v67 = vpop.f32.mrf.mxu0
    %v68 = vadd.f32 %v38, %v67
    %69 = vdwg.mxu0
    %v70 = vld [vmem:[%s2] sm:$0xff]
    %v71 = vld [vmem:[%s2 + $0x8] sm:$0xff]
    %v72 = vld [vmem:[%s2 + $0x10] sm:$0xff]
    %v73 = vld [vmem:[%s2 + $0x18] sm:$0xff]
    %v75 = vsel %vm40, 0.0, 0
    %77 = vmatpush.msra.mxu0 0.0
    %78 = vmatpush.msra.mxu0 0.0
    %79 = vmatpush.msra.mxu0 0.0
    %80 = vmatpush.msra.mxu0 0.0
    %81 = vmatpush.msra.mxu0 0.0
    %82 = vmatpush.msra.mxu0 0.0
    %83 = vmatpush.msra.mxu0 0.0
    %84 = vmatpush.msra.mxu0 0.0
    %85 = vmatpush.msra.mxu0 0.0
    %86 = vmatpush.msra.mxu0 0.0
    %87 = vmatpush.msra.mxu0 0.0
    %88 = vmatpush.msra.mxu0 0.0
    %89 = vmatpush.msra.mxu0 %v73
    %90 = vmatpush.msra.mxu0 %v72
    %91 = vmatpush.msra.mxu0 %v71
    %92 = vmatpush.msra.mxu0 %v70
    %93 = vmatmul.f32.gmra.mxu0 %v75
    %v94 = vpop.f32.mrf.mxu0
    %v95 = vadd.f32 0.0, %v94
    %96 = vdwg.mxu0
    %v98 = vrot.slane %v95, 1
    %v101 = vadd.f32 %v65, %v95
    %v102 = vadd.f32 %v68, %v98
    %v103 = vxor.u32 %v101, 2147483648
    %v104 = vxor.u32 %v102, 2147483648
    %v105 = vmul.f32 %v103, 1.442695
    %v106 = vpow.pop %v105
    %v107 = vmul.f32 %v104, 1.442695
    %v108 = vpow.pop %v107
    %v109 = vadd.f32 %v106, 1.0
    %v110 = vadd.f32 %v108, 1.0
    %v111 = vrcp.pop %v109
    %v112 = vmul.f32 %v109, %v111
    %v113 = vsub.f32 1.0, %v112
    %v114 = vmul.f32 %v111, %v113
    %v115 = vadd.f32 %v111, %v114
    %vm116 = vweird.f32 %v109
    %vm117 = vweird.f32 %v111
    %vm118 = vmor %vm116, %vm117
    %v119 = vsel %vm118, %v111, %v115
    %v120 = vand.u32 2147483647, %v109
    %vm121 = vcmp.eq.f32.partialorder %v120, 8.507059e+37
    %v122 = vand.u32 %v109, 2147483648
    %v123 = vor.u32 1.1754944e-38, %v122
    %v124 = vsel %vm121, %v123, %v119
    %v125 = vmul.f32 1.0, %v124
    %v126 = vrcp.pop %v110
    %v127 = vmul.f32 %v110, %v126
    %v128 = vsub.f32 1.0, %v127
    %v129 = vmul.f32 %v126, %v128
    %v130 = vadd.f32 %v126, %v129
    %vm131 = vweird.f32 %v110
    %vm132 = vweird.f32 %v126
    %vm133 = vmor %vm131, %vm132
    %v134 = vsel %vm133, %v126, %v130
    %v135 = vand.u32 2147483647, %v110
    %vm136 = vcmp.eq.f32.partialorder %v135, 8.507059e+37
    %v137 = vand.u32 %v110, 2147483648
    %v138 = vor.u32 1.1754944e-38, %v137
    %v139 = vsel %vm136, %v138, %v134
    %v140 = vmul.f32 1.0, %v139
    %v141 = vtanh.pop %v101
    %v142 = vtanh.pop %v102
    %v143 = vmul.f32 %v125, 0.0
    %v144 = vmul.f32 %v140, 0.0
    %147 = vrot.lane.b32.xlu0 %v141, 64
    %v148 = vpop.permute.xlu0 %147
    %149 = vrot.lane.b32.xlu0 %v142, 64
    %v150 = vpop.permute.xlu0 %149
    %v153 = vmul.f32 %v125, %v148
    %v154 = vmul.f32 %v140, %v150
    %157 = vrot.lane.b32.xlu0 %v153, 32
    %v158 = vpop.permute.xlu0 %157
    %159 = vrot.lane.b32.xlu0 %v154, 32
    %v160 = vpop.permute.xlu0 %159
    %v163 = vadd.f32 %v143, %v158
    %v164 = vadd.f32 %v144, %v160
    %v165 = vtanh.pop %v163
    %v166 = vtanh.pop %v164
    %169 = vrot.lane.b32.xlu0 %v165, 64
    %v170 = vpop.permute.xlu0 %169
    %171 = vrot.lane.b32.xlu0 %v166, 64
    %v172 = vpop.permute.xlu0 %171
    %v175 = vmul.f32 %v125, %v170
    %v176 = vmul.f32 %v140, %v172
    %179 = vrot.lane.b32.xlu0 %v175, 32
    %v180 = vpop.permute.xlu0 %179
    %181 = vrot.lane.b32.xlu0 %v176, 32
    %v182 = vpop.permute.xlu0 %181
    %vm185 = vcmask 253952
    %186 = vst.msk [vmem:[#allocation2] sm:$0x1] %vm185, %v180
    %187 = vst.msk [vmem:[#allocation2 + $0x8] sm:$0x1] %vm185, %v182
    %v188 = vrot.slane %v176, 7
    %vm189 = vcmask 1041409
    %v190 = vsel %vm189, %v188, %v175
    %191 = vrot.lane.b32.xlu0 %v190, 32
    %v192 = vpop.permute.xlu0 %191
    %v193 = vsel %vm40, %v192, 0
    %195 = vmatpush.msra.mxu0 0.0
    %196 = vmatpush.msra.mxu0 0.0
    %197 = vmatpush.msra.mxu0 0.0
    %198 = vmatpush.msra.mxu0 0.0
    %199 = vmatpush.msra.mxu0 0.0
    %200 = vmatpush.msra.mxu0 0.0
    %201 = vmatpush.msra.mxu0 0.0
    %202 = vmatpush.msra.mxu0 0.0
    %203 = vmatpush.msra.mxu0 0.0
    %204 = vmatpush.msra.mxu0 0.0
    %205 = vmatpush.msra.mxu0 0.0
    %206 = vmatpush.msra.mxu0 0.0
    %207 = vmatpush.msra.mxu0 %v73
    %208 = vmatpush.msra.mxu0 %v72
    %209 = vmatpush.msra.mxu0 %v71
    %210 = vmatpush.msra.mxu0 %v70
    %211 = vmatmul.f32.gmra.mxu0 %v193
    %v212 = vpop.f32.mrf.mxu0
    %v213 = vadd.f32 0.0, %v212
    %214 = vdwg.mxu0
    %v216 = vrot.slane %v213, 7
    %v219 = vadd.f32 %v65, %v216
    %v220 = vadd.f32 %v68, %v213
    %v221 = vxor.u32 %v219, 2147483648
    %v222 = vxor.u32 %v220, 2147483648
    %v223 = vmul.f32 %v221, 1.442695
    %v224 = vpow.pop %v223
    %v225 = vmul.f32 %v222, 1.442695
    %v226 = vpow.pop %v225
    %v227 = vadd.f32 %v224, 1.0
    %v228 = vadd.f32 %v226, 1.0
    %v229 = vrcp.pop %v227
    %v230 = vmul.f32 %v227, %v229
    %v231 = vsub.f32 1.0, %v230
    %v232 = vmul.f32 %v229, %v231
    %v233 = vadd.f32 %v229, %v232
    %vm234 = vweird.f32 %v227
    %vm235 = vweird.f32 %v229
    %vm236 = vmor %vm234, %vm235
    %v237 = vsel %vm236, %v229, %v233
    %v238 = vand.u32 2147483647, %v227
    %vm239 = vcmp.eq.f32.partialorder %v238, 8.507059e+37
    %v240 = vand.u32 %v227, 2147483648
    %v241 = vor.u32 1.1754944e-38, %v240
    %v242 = vsel %vm239, %v241, %v237
    %v243 = vmul.f32 1.0, %v242
    %v244 = vrcp.pop %v228
    %v245 = vmul.f32 %v228, %v244
    %v246 = vsub.f32 1.0, %v245
    %v247 = vmul.f32 %v244, %v246
    %v248 = vadd.f32 %v244, %v247
    %vm249 = vweird.f32 %v228
    %vm250 = vweird.f32 %v244
    %vm251 = vmor %vm249, %vm250
    %v252 = vsel %vm251, %v244, %v248
    %v253 = vand.u32 2147483647, %v228
    %vm254 = vcmp.eq.f32.partialorder %v253, 8.507059e+37
    %v255 = vand.u32 %v228, 2147483648
    %v256 = vor.u32 1.1754944e-38, %v255
    %v257 = vsel %vm254, %v256, %v252
    %v258 = vmul.f32 1.0, %v257
    %v259 = vtanh.pop %v219
    %v260 = vtanh.pop %v220
    %v263 = vrot.slane %v163, 7
    %v264 = vrot.slane %v164, 7
    %v267 = vmul.f32 %v243, %v263
    %v268 = vmul.f32 %v258, %v264
    %271 = vrot.lane.b32.xlu0 %v259, 64
    %v272 = vpop.permute.xlu0 %271
    %273 = vrot.lane.b32.xlu0 %v260, 64
    %v274 = vpop.permute.xlu0 %273
    %v277 = vmul.f32 %v243, %v272
    %v278 = vmul.f32 %v258, %v274
    %281 = vrot.lane.b32.xlu0 %v277, 32
    %v282 = vpop.permute.xlu0 %281
    %283 = vrot.lane.b32.xlu0 %v278, 32
    %v284 = vpop.permute.xlu0 %283
    %v287 = vadd.f32 %v267, %v282
    %v288 = vadd.f32 %v268, %v284
    %v289 = vtanh.pop %v287
    %v290 = vtanh.pop %v288
    %293 = vrot.lane.b32.xlu0 %v289, 64
    %v294 = vpop.permute.xlu0 %293
    %295 = vrot.lane.b32.xlu0 %v290, 64
    %v296 = vpop.permute.xlu0 %295
    %v299 = vmul.f32 %v243, %v294
    %v300 = vmul.f32 %v258, %v296
    %303 = vrot.lane.b32.xlu0 %v299, 32
    %v304 = vpop.permute.xlu0 %303
    %305 = vrot.lane.b32.xlu0 %v300, 32
    %v306 = vpop.permute.xlu0 %305
    %vm309 = vcmask 254977
    %310 = vst.msk [vmem:[#allocation2] sm:$0x2] %vm309, %v304
    %311 = vst.msk [vmem:[#allocation2 + $0x8] sm:$0x2] %vm309, %v306
    %v312 = vrot.slane %v299, 1
    %v313 = vsel %vm189, %v300, %v312
    %314 = vrot.lane.b32.xlu0 %v313, 32
    %v315 = vpop.permute.xlu0 %314
    %v316 = vsel %vm40, %v315, 0
    %318 = vmatpush.msra.mxu0 0.0
    %319 = vmatpush.msra.mxu0 0.0
    %320 = vmatpush.msra.mxu0 0.0
    %321 = vmatpush.msra.mxu0 0.0
    %322 = vmatpush.msra.mxu0 0.0
    %323 = vmatpush.msra.mxu0 0.0
    %324 = vmatpush.msra.mxu0 0.0
    %325 = vmatpush.msra.mxu0 0.0
    %326 = vmatpush.msra.mxu0 0.0
    %327 = vmatpush.msra.mxu0 0.0
    %328 = vmatpush.msra.mxu0 0.0
    %329 = vmatpush.msra.mxu0 0.0
    %330 = vmatpush.msra.mxu0 %v73
    %331 = vmatpush.msra.mxu0 %v72
    %332 = vmatpush.msra.mxu0 %v71
    %333 = vmatpush.msra.mxu0 %v70
    %334 = vmatmul.f32.gmra.mxu0 %v316
    %v335 = vpop.f32.mrf.mxu0
    %v336 = vadd.f32 0.0, %v335
    %337 = vdwg.mxu0
    %v339 = vrot.slane %v336, 6
    %v340 = vrot.slane %v336, 7
    %v343 = vadd.f32 %v65, %v339
    %v344 = vadd.f32 %v68, %v340
    %v345 = vxor.u32 %v343, 2147483648
    %v346 = vxor.u32 %v344, 2147483648
    %v347 = vmul.f32 %v345, 1.442695
    %v348 = vpow.pop %v347
    %v349 = vmul.f32 %v346, 1.442695
    %v350 = vpow.pop %v349
    %v351 = vadd.f32 %v348, 1.0
    %v352 = vadd.f32 %v350, 1.0
    %v353 = vrcp.pop %v351
    %v354 = vmul.f32 %v351, %v353
    %v355 = vsub.f32 1.0, %v354
    %v356 = vmul.f32 %v353, %v355
    %v357 = vadd.f32 %v353, %v356
    %vm358 = vweird.f32 %v351
    %vm359 = vweird.f32 %v353
    %vm360 = vmor %vm358, %vm359
    %v361 = vsel %vm360, %v353, %v357
    %v362 = vand.u32 2147483647, %v351
    %vm363 = vcmp.eq.f32.partialorder %v362, 8.507059e+37
    %v364 = vand.u32 %v351, 2147483648
    %v365 = vor.u32 1.1754944e-38, %v364
    %v366 = vsel %vm363, %v365, %v361
    %v367 = vmul.f32 1.0, %v366
    %v368 = vrcp.pop %v352
    %v369 = vmul.f32 %v352, %v368
    %v370 = vsub.f32 1.0, %v369
    %v371 = vmul.f32 %v368, %v370
    %v372 = vadd.f32 %v368, %v371
    %vm373 = vweird.f32 %v352
    %vm374 = vweird.f32 %v368
    %vm375 = vmor %vm373, %vm374
    %v376 = vsel %vm375, %v368, %v372
    %v377 = vand.u32 2147483647, %v352
    %vm378 = vcmp.eq.f32.partialorder %v377, 8.507059e+37
    %v379 = vand.u32 %v352, 2147483648
    %v380 = vor.u32 1.1754944e-38, %v379
    %v381 = vsel %vm378, %v380, %v376
    %v382 = vmul.f32 1.0, %v381
    %v383 = vtanh.pop %v343
    %v384 = vtanh.pop %v344
    %v387 = vrot.slane %v287, 7
    %v388 = vrot.slane %v288, 7
    %v391 = vmul.f32 %v367, %v387
    %v392 = vmul.f32 %v382, %v388
    %395 = vrot.lane.b32.xlu0 %v383, 64
    %v396 = vpop.permute.xlu0 %395
    %397 = vrot.lane.b32.xlu0 %v384, 64
    %v398 = vpop.permute.xlu0 %397
    %v401 = vmul.f32 %v367, %v396
    %v402 = vmul.f32 %v382, %v398
    %405 = vrot.lane.b32.xlu0 %v401, 32
    %v406 = vpop.permute.xlu0 %405
    %407 = vrot.lane.b32.xlu0 %v402, 32
    %v408 = vpop.permute.xlu0 %407
    %v411 = vadd.f32 %v391, %v406
    %v412 = vadd.f32 %v392, %v408
    %v413 = vtanh.pop %v411
    %v414 = vtanh.pop %v412
    %417 = vrot.lane.b32.xlu0 %v413, 64
    %v418 = vpop.permute.xlu0 %417
    %419 = vrot.lane.b32.xlu0 %v414, 64
    %v420 = vpop.permute.xlu0 %419
    %v423 = vmul.f32 %v367, %v418
    %v424 = vmul.f32 %v382, %v420
    %427 = vrot.lane.b32.xlu0 %v423, 32
    %v428 = vpop.permute.xlu0 %427
    %429 = vrot.lane.b32.xlu0 %v424, 32
    %v430 = vpop.permute.xlu0 %429
    %vm433 = vcmask 256002
    %434 = vst.msk [vmem:[#allocation2] sm:$0x4] %vm433, %v428
    %435 = vst.msk [vmem:[#allocation2 + $0x8] sm:$0x4] %vm433, %v430
    %v436 = vrot.slane %v423, 2
    %v437 = vrot.slane %v424, 1
    %v438 = vsel %vm189, %v437, %v436
    %439 = vrot.lane.b32.xlu0 %v438, 32
    %v440 = vpop.permute.xlu0 %439
    %v441 = vsel %vm40, %v440, 0
    %443 = vmatpush.msra.mxu0 0.0
    %444 = vmatpush.msra.mxu0 0.0
    %445 = vmatpush.msra.mxu0 0.0
    %446 = vmatpush.msra.mxu0 0.0
    %447 = vmatpush.msra.mxu0 0.0
    %448 = vmatpush.msra.mxu0 0.0
    %449 = vmatpush.msra.mxu0 0.0
    %450 = vmatpush.msra.mxu0 0.0
    %451 = vmatpush.msra.mxu0 0.0
    %452 = vmatpush.msra.mxu0 0.0
    %453 = vmatpush.msra.mxu0 0.0
    %454 = vmatpush.msra.mxu0 0.0
    %455 = vmatpush.msra.mxu0 %v73
    %456 = vmatpush.msra.mxu0 %v72
    %457 = vmatpush.msra.mxu0 %v71
    %458 = vmatpush.msra.mxu0 %v70
    %459 = vmatmul.f32.gmra.mxu0 %v441
    %v460 = vpop.f32.mrf.mxu0
    %v461 = vadd.f32 0.0, %v460
    %462 = vdwg.mxu0
    %v464 = vrot.slane %v461, 5
    %v465 = vrot.slane %v461, 6
    %v468 = vadd.f32 %v65, %v464
    %v469 = vadd.f32 %v68, %v465
    %v470 = vxor.u32 %v468, 2147483648
    %v471 = vxor.u32 %v469, 2147483648
    %v472 = vmul.f32 %v470, 1.442695
    %v473 = vpow.pop %v472
    %v474 = vmul.f32 %v471, 1.442695
    %v475 = vpow.pop %v474
    %v476 = vadd.f32 %v473, 1.0
    %v477 = vadd.f32 %v475, 1.0
    %v478 = vrcp.pop %v476
    %v479 = vmul.f32 %v476, %v478
    %v480 = vsub.f32 1.0, %v479
    %v481 = vmul.f32 %v478, %v480
    %v482 = vadd.f32 %v478, %v481
    %vm483 = vweird.f32 %v476
    %vm484 = vweird.f32 %v478
    %vm485 = vmor %vm483, %vm484
    %v486 = vsel %vm485, %v478, %v482
    %v487 = vand.u32 2147483647, %v476
    %vm488 = vcmp.eq.f32.partialorder %v487, 8.507059e+37
    %v489 = vand.u32 %v476, 2147483648
    %v490 = vor.u32 1.1754944e-38, %v489
    %v491 = vsel %vm488, %v490, %v486
    %v492 = vmul.f32 1.0, %v491
    %v493 = vrcp.pop %v477
    %v494 = vmul.f32 %v477, %v493
    %v495 = vsub.f32 1.0, %v494
    %v496 = vmul.f32 %v493, %v495
    %v497 = vadd.f32 %v493, %v496
    %vm498 = vweird.f32 %v477
    %vm499 = vweird.f32 %v493
    %vm500 = vmor %vm498, %vm499
    %v501 = vsel %vm500, %v493, %v497
    %v502 = vand.u32 2147483647, %v477
    %vm503 = vcmp.eq.f32.partialorder %v502, 8.507059e+37
    %v504 = vand.u32 %v477, 2147483648
    %v505 = vor.u32 1.1754944e-38, %v504
    %v506 = vsel %vm503, %v505, %v501
    %v507 = vmul.f32 1.0, %v506
    %v508 = vtanh.pop %v468
    %v509 = vtanh.pop %v469
    %v512 = vrot.slane %v411, 7
    %v513 = vrot.slane %v412, 7
    %v516 = vmul.f32 %v492, %v512
    %v517 = vmul.f32 %v507, %v513
    %520 = vrot.lane.b32.xlu0 %v508, 64
    %v521 = vpop.permute.xlu0 %520
    %522 = vrot.lane.b32.xlu0 %v509, 64
    %v523 = vpop.permute.xlu0 %522
    %v526 = vmul.f32 %v492, %v521
    %v527 = vmul.f32 %v507, %v523
    %530 = vrot.lane.b32.xlu0 %v526, 32
    %v531 = vpop.permute.xlu0 %530
    %532 = vrot.lane.b32.xlu0 %v527, 32
    %v533 = vpop.permute.xlu0 %532
    %v536 = vadd.f32 %v516, %v531
    %v537 = vadd.f32 %v517, %v533
    %v538 = vtanh.pop %v536
    %v539 = vtanh.pop %v537
    %542 = vrot.lane.b32.xlu0 %v538, 64
    %v543 = vpop.permute.xlu0 %542
    %544 = vrot.lane.b32.xlu0 %v539, 64
    %v545 = vpop.permute.xlu0 %544
    %v548 = vmul.f32 %v492, %v543
    %v549 = vmul.f32 %v507, %v545
    %552 = vrot.lane.b32.xlu0 %v548, 32
    %v553 = vpop.permute.xlu0 %552
    %554 = vrot.lane.b32.xlu0 %v549, 32
    %v555 = vpop.permute.xlu0 %554
    %vm558 = vcmask 257027
    %559 = vst.msk [vmem:[#allocation2] sm:$0x8] %vm558, %v553
    %560 = vst.msk [vmem:[#allocation2 + $0x8] sm:$0x8] %vm558, %v555
    %v561 = vrot.slane %v548, 3
    %v562 = vrot.slane %v549, 2
    %v563 = vsel %vm189, %v562, %v561
    %564 = vrot.lane.b32.xlu0 %v563, 32
    %v565 = vpop.permute.xlu0 %564
    %v566 = vsel %vm40, %v565, 0
    %568 = vmatpush.msra.mxu0 0.0
    %569 = vmatpush.msra.mxu0 0.0
    %570 = vmatpush.msra.mxu0 0.0
    %571 = vmatpush.msra.mxu0 0.0
    %572 = vmatpush.msra.mxu0 0.0
    %573 = vmatpush.msra.mxu0 0.0
    %574 = vmatpush.msra.mxu0 0.0
    %575 = vmatpush.msra.mxu0 0.0
    %576 = vmatpush.msra.mxu0 0.0
    %577 = vmatpush.msra.mxu0 0.0
    %578 = vmatpush.msra.mxu0 0.0
    %579 = vmatpush.msra.mxu0 0.0
    %580 = vmatpush.msra.mxu0 %v73
    %581 = vmatpush.msra.mxu0 %v72
    %582 = vmatpush.msra.mxu0 %v71
    %583 = vmatpush.msra.mxu0 %v70
    %584 = vmatmul.f32.gmra.mxu0 %v566
    %v585 = vpop.f32.mrf.mxu0
    %v586 = vadd.f32 0.0, %v585
    %587 = vdwg.mxu0
    %v589 = vrot.slane %v586, 4
    %v590 = vrot.slane %v586, 5
    %v593 = vadd.f32 %v65, %v589
    %v594 = vadd.f32 %v68, %v590
    %v595 = vxor.u32 %v593, 2147483648
    %v596 = vxor.u32 %v594, 2147483648
    %v597 = vmul.f32 %v595, 1.442695
    %v598 = vpow.pop %v597
    %v599 = vmul.f32 %v596, 1.442695
    %v600 = vpow.pop %v599
    %v601 = vadd.f32 %v598, 1.0
    %v602 = vadd.f32 %v600, 1.0
    %v603 = vrcp.pop %v601
    %v604 = vmul.f32 %v601, %v603
    %v605 = vsub.f32 1.0, %v604
    %v606 = vmul.f32 %v603, %v605
    %v607 = vadd.f32 %v603, %v606
    %vm608 = vweird.f32 %v601
    %vm609 = vweird.f32 %v603
    %vm610 = vmor %vm608, %vm609
    %v611 = vsel %vm610, %v603, %v607
    %v612 = vand.u32 2147483647, %v601
    %vm613 = vcmp.eq.f32.partialorder %v612, 8.507059e+37
    %v614 = vand.u32 %v601, 2147483648
    %v615 = vor.u32 1.1754944e-38, %v614
    %v616 = vsel %vm613, %v615, %v611
    %v617 = vmul.f32 1.0, %v616
    %v618 = vrcp.pop %v602
    %v619 = vmul.f32 %v602, %v618
    %v620 = vsub.f32 1.0, %v619
    %v621 = vmul.f32 %v618, %v620
    %v622 = vadd.f32 %v618, %v621
    %vm623 = vweird.f32 %v602
    %vm624 = vweird.f32 %v618
    %vm625 = vmor %vm623, %vm624
    %v626 = vsel %vm625, %v618, %v622
    %v627 = vand.u32 2147483647, %v602
    %vm628 = vcmp.eq.f32.partialorder %v627, 8.507059e+37
    %v629 = vand.u32 %v602, 2147483648
    %v630 = vor.u32 1.1754944e-38, %v629
    %v631 = vsel %vm628, %v630, %v626
    %v632 = vmul.f32 1.0, %v631
    %v633 = vtanh.pop %v593
    %v634 = vtanh.pop %v594
    %v637 = vrot.slane %v536, 7
    %v638 = vrot.slane %v537, 7
    %v641 = vmul.f32 %v617, %v637
    %v642 = vmul.f32 %v632, %v638
    %645 = vrot.lane.b32.xlu0 %v633, 64
    %v646 = vpop.permute.xlu0 %645
    %647 = vrot.lane.b32.xlu0 %v634, 64
    %v648 = vpop.permute.xlu0 %647
    %v651 = vmul.f32 %v617, %v646
    %v652 = vmul.f32 %v632, %v648
    %655 = vrot.lane.b32.xlu0 %v651, 32
    %v656 = vpop.permute.xlu0 %655
    %657 = vrot.lane.b32.xlu0 %v652, 32
    %v658 = vpop.permute.xlu0 %657
    %v661 = vadd.f32 %v641, %v656
    %v662 = vadd.f32 %v642, %v658
    %v663 = vtanh.pop %v661
    %v664 = vtanh.pop %v662
    %667 = vrot.lane.b32.xlu0 %v663, 64
    %v668 = vpop.permute.xlu0 %667
    %669 = vrot.lane.b32.xlu0 %v664, 64
    %v670 = vpop.permute.xlu0 %669
    %v673 = vmul.f32 %v617, %v668
    %v674 = vmul.f32 %v632, %v670
    %677 = vrot.lane.b32.xlu0 %v673, 32
    %v678 = vpop.permute.xlu0 %677
    %679 = vrot.lane.b32.xlu0 %v674, 32
    %v680 = vpop.permute.xlu0 %679
    %vm683 = vcmask 258052
    %684 = vst.msk [vmem:[#allocation2] sm:$0x10] %vm683, %v678
    %685 = vst.msk [vmem:[#allocation2 + $0x8] sm:$0x10] %vm683, %v680
    %v686 = vrot.slane %v673, 4
    %v687 = vrot.slane %v674, 3
    %v688 = vsel %vm189, %v687, %v686
    %689 = vrot.lane.b32.xlu0 %v688, 32
    %v690 = vpop.permute.xlu0 %689
    %v691 = vsel %vm40, %v690, 0
    %693 = vmatpush.msra.mxu0 0.0
    %694 = vmatpush.msra.mxu0 0.0
    %695 = vmatpush.msra.mxu0 0.0
    %696 = vmatpush.msra.mxu0 0.0
    %697 = vmatpush.msra.mxu0 0.0
    %698 = vmatpush.msra.mxu0 0.0
    %699 = vmatpush.msra.mxu0 0.0
    %700 = vmatpush.msra.mxu0 0.0
    %701 = vmatpush.msra.mxu0 0.0
    %702 = vmatpush.msra.mxu0 0.0
    %703 = vmatpush.msra.mxu0 0.0
    %704 = vmatpush.msra.mxu0 0.0
    %705 = vmatpush.msra.mxu0 %v73
    %706 = vmatpush.msra.mxu0 %v72
    %707 = vmatpush.msra.mxu0 %v71
    %708 = vmatpush.msra.mxu0 %v70
    %709 = vmatmul.f32.gmra.mxu0 %v691
    %v710 = vpop.f32.mrf.mxu0
    %v711 = vadd.f32 0.0, %v710
    %712 = vdwg.mxu0
    %v714 = vrot.slane %v711, 3
    %v715 = vrot.slane %v711, 4
    %v718 = vadd.f32 %v65, %v714
    %v719 = vadd.f32 %v68, %v715
    %v720 = vxor.u32 %v718, 2147483648
    %v721 = vxor.u32 %v719, 2147483648
    %v722 = vmul.f32 %v720, 1.442695
    %v723 = vpow.pop %v722
    %v724 = vmul.f32 %v721, 1.442695
    %v725 = vpow.pop %v724
    %v726 = vadd.f32 %v723, 1.0
    %v727 = vadd.f32 %v725, 1.0
    %v728 = vrcp.pop %v726
    %v729 = vmul.f32 %v726, %v728
    %v730 = vsub.f32 1.0, %v729
    %v731 = vmul.f32 %v728, %v730
    %v732 = vadd.f32 %v728, %v731
    %vm733 = vweird.f32 %v726
    %vm734 = vweird.f32 %v728
    %vm735 = vmor %vm733, %vm734
    %v736 = vsel %vm735, %v728, %v732
    %v737 = vand.u32 2147483647, %v726
    %vm738 = vcmp.eq.f32.partialorder %v737, 8.507059e+37
    %v739 = vand.u32 %v726, 2147483648
    %v740 = vor.u32 1.1754944e-38, %v739
    %v741 = vsel %vm738, %v740, %v736
    %v742 = vmul.f32 1.0, %v741
    %v743 = vrcp.pop %v727
    %v744 = vmul.f32 %v727, %v743
    %v745 = vsub.f32 1.0, %v744
    %v746 = vmul.f32 %v743, %v745
    %v747 = vadd.f32 %v743, %v746
    %vm748 = vweird.f32 %v727
    %vm749 = vweird.f32 %v743
    %vm750 = vmor %vm748, %vm749
    %v751 = vsel %vm750, %v743, %v747
    %v752 = vand.u32 2147483647, %v727
    %vm753 = vcmp.eq.f32.partialorder %v752, 8.507059e+37
    %v754 = vand.u32 %v727, 2147483648
    %v755 = vor.u32 1.1754944e-38, %v754
    %v756 = vsel %vm753, %v755, %v751
    %v757 = vmul.f32 1.0, %v756
    %v758 = vtanh.pop %v718
    %v759 = vtanh.pop %v719
    %v762 = vrot.slane %v661, 7
    %v763 = vrot.slane %v662, 7
    %v766 = vmul.f32 %v742, %v762
    %v767 = vmul.f32 %v757, %v763
    %770 = vrot.lane.b32.xlu0 %v758, 64
    %v771 = vpop.permute.xlu0 %770
    %772 = vrot.lane.b32.xlu0 %v759, 64
    %v773 = vpop.permute.xlu0 %772
    %v776 = vmul.f32 %v742, %v771
    %v777 = vmul.f32 %v757, %v773
    %780 = vrot.lane.b32.xlu0 %v776, 32
    %v781 = vpop.permute.xlu0 %780
    %782 = vrot.lane.b32.xlu0 %v777, 32
    %v783 = vpop.permute.xlu0 %782
    %v786 = vadd.f32 %v766, %v781
    %v787 = vadd.f32 %v767, %v783
    %v788 = vtanh.pop %v786
    %v789 = vtanh.pop %v787
    %792 = vrot.lane.b32.xlu0 %v788, 64
    %v793 = vpop.permute.xlu0 %792
    %794 = vrot.lane.b32.xlu0 %v789, 64
    %v795 = vpop.permute.xlu0 %794
    %v798 = vmul.f32 %v742, %v793
    %v799 = vmul.f32 %v757, %v795
    %802 = vrot.lane.b32.xlu0 %v798, 32
    %v803 = vpop.permute.xlu0 %802
    %804 = vrot.lane.b32.xlu0 %v799, 32
    %v805 = vpop.permute.xlu0 %804
    %vm808 = vcmask 259077
    %809 = vst.msk [vmem:[#allocation2] sm:$0x20] %vm808, %v803
    %810 = vst.msk [vmem:[#allocation2 + $0x8] sm:$0x20] %vm808, %v805
    %v811 = vrot.slane %v798, 5
    %v812 = vrot.slane %v799, 4
    %v813 = vsel %vm189, %v812, %v811
    %814 = vrot.lane.b32.xlu0 %v813, 32
    %v815 = vpop.permute.xlu0 %814
    %v816 = vsel %vm40, %v815, 0
    %818 = vmatpush.msra.mxu0 0.0
    %819 = vmatpush.msra.mxu0 0.0
    %820 = vmatpush.msra.mxu0 0.0
    %821 = vmatpush.msra.mxu0 0.0
    %822 = vmatpush.msra.mxu0 0.0
    %823 = vmatpush.msra.mxu0 0.0
    %824 = vmatpush.msra.mxu0 0.0
    %825 = vmatpush.msra.mxu0 0.0
    %826 = vmatpush.msra.mxu0 0.0
    %827 = vmatpush.msra.mxu0 0.0
    %828 = vmatpush.msra.mxu0 0.0
    %829 = vmatpush.msra.mxu0 0.0
    %830 = vmatpush.msra.mxu0 %v73
    %831 = vmatpush.msra.mxu0 %v72
    %832 = vmatpush.msra.mxu0 %v71
    %833 = vmatpush.msra.mxu0 %v70
    %834 = vmatmul.f32.gmra.mxu0 %v816
    %v835 = vpop.f32.mrf.mxu0
    %v836 = vadd.f32 0.0, %v835
    %837 = vdwg.mxu0
    %v839 = vrot.slane %v836, 2
    %v840 = vrot.slane %v836, 3
    %v843 = vadd.f32 %v65, %v839
    %v844 = vadd.f32 %v68, %v840
    %v845 = vxor.u32 %v843, 2147483648
    %v846 = vxor.u32 %v844, 2147483648
    %v847 = vmul.f32 %v845, 1.442695
    %v848 = vpow.pop %v847
    %v849 = vmul.f32 %v846, 1.442695
    %v850 = vpow.pop %v849
    %v851 = vadd.f32 %v848, 1.0
    %v852 = vadd.f32 %v850, 1.0
    %v853 = vrcp.pop %v851
    %v854 = vmul.f32 %v851, %v853
    %v855 = vsub.f32 1.0, %v854
    %v856 = vmul.f32 %v853, %v855
    %v857 = vadd.f32 %v853, %v856
    %vm858 = vweird.f32 %v851
    %vm859 = vweird.f32 %v853
    %vm860 = vmor %vm858, %vm859
    %v861 = vsel %vm860, %v853, %v857
    %v862 = vand.u32 2147483647, %v851
    %vm863 = vcmp.eq.f32.partialorder %v862, 8.507059e+37
    %v864 = vand.u32 %v851, 2147483648
    %v865 = vor.u32 1.1754944e-38, %v864
    %v866 = vsel %vm863, %v865, %v861
    %v867 = vmul.f32 1.0, %v866
    %v868 = vrcp.pop %v852
    %v869 = vmul.f32 %v852, %v868
    %v870 = vsub.f32 1.0, %v869
    %v871 = vmul.f32 %v868, %v870
    %v872 = vadd.f32 %v868, %v871
    %vm873 = vweird.f32 %v852
    %vm874 = vweird.f32 %v868
    %vm875 = vmor %vm873, %vm874
    %v876 = vsel %vm875, %v868, %v872
    %v877 = vand.u32 2147483647, %v852
    %vm878 = vcmp.eq.f32.partialorder %v877, 8.507059e+37
    %v879 = vand.u32 %v852, 2147483648
    %v880 = vor.u32 1.1754944e-38, %v879
    %v881 = vsel %vm878, %v880, %v876
    %v882 = vmul.f32 1.0, %v881
    %v883 = vtanh.pop %v843
    %v884 = vtanh.pop %v844
    %v887 = vrot.slane %v786, 7
    %v888 = vrot.slane %v787, 7
    %v891 = vmul.f32 %v867, %v887
    %v892 = vmul.f32 %v882, %v888
    %895 = vrot.lane.b32.xlu0 %v883, 64
    %v896 = vpop.permute.xlu0 %895
    %897 = vrot.lane.b32.xlu0 %v884, 64
    %v898 = vpop.permute.xlu0 %897
    %v901 = vmul.f32 %v867, %v896
    %v902 = vmul.f32 %v882, %v898
    %905 = vrot.lane.b32.xlu0 %v901, 32
    %v906 = vpop.permute.xlu0 %905
    %907 = vrot.lane.b32.xlu0 %v902, 32
    %v908 = vpop.permute.xlu0 %907
    %v911 = vadd.f32 %v891, %v906
    %v912 = vadd.f32 %v892, %v908
    %v913 = vtanh.pop %v911
    %v914 = vtanh.pop %v912
    %917 = vrot.lane.b32.xlu0 %v913, 64
    %v918 = vpop.permute.xlu0 %917
    %919 = vrot.lane.b32.xlu0 %v914, 64
    %v920 = vpop.permute.xlu0 %919
    %v923 = vmul.f32 %v867, %v918
    %v924 = vmul.f32 %v882, %v920
    %927 = vrot.lane.b32.xlu0 %v923, 32
    %v928 = vpop.permute.xlu0 %927
    %929 = vrot.lane.b32.xlu0 %v924, 32
    %v930 = vpop.permute.xlu0 %929
    %vm933 = vcmask 260102
    %934 = vst.msk [vmem:[#allocation2] sm:$0x40] %vm933, %v928
    %935 = vst.msk [vmem:[#allocation2 + $0x8] sm:$0x40] %vm933, %v930
    %v936 = vrot.slane %v923, 6
    %v937 = vrot.slane %v924, 5
    %v938 = vsel %vm189, %v937, %v936
    %939 = vrot.lane.b32.xlu0 %v938, 32
    %v940 = vpop.permute.xlu0 %939
    %v941 = vsel %vm40, %v940, 0
    %943 = vmatpush.msra.mxu0 0.0
    %944 = vmatpush.msra.mxu0 0.0
    %945 = vmatpush.msra.mxu0 0.0
    %946 = vmatpush.msra.mxu0 0.0
    %947 = vmatpush.msra.mxu0 0.0
    %948 = vmatpush.msra.mxu0 0.0
    %949 = vmatpush.msra.mxu0 0.0
    %950 = vmatpush.msra.mxu0 0.0
    %951 = vmatpush.msra.mxu0 0.0
    %952 = vmatpush.msra.mxu0 0.0
    %953 = vmatpush.msra.mxu0 0.0
    %954 = vmatpush.msra.mxu0 0.0
    %955 = vmatpush.msra.mxu0 %v73
    %956 = vmatpush.msra.mxu0 %v72
    %957 = vmatpush.msra.mxu0 %v71
    %958 = vmatpush.msra.mxu0 %v70
    %959 = vmatmul.f32.gmra.mxu0 %v941
    %v960 = vpop.f32.mrf.mxu0
    %v961 = vadd.f32 0.0, %v960
    %962 = vdwg.mxu0
    %v964 = vrot.slane %v961, 1
    %v965 = vrot.slane %v961, 2
    %v968 = vadd.f32 %v65, %v964
    %v969 = vadd.f32 %v68, %v965
    %v970 = vxor.u32 %v968, 2147483648
    %v971 = vxor.u32 %v969, 2147483648
    %v972 = vmul.f32 %v970, 1.442695
    %v973 = vpow.pop %v972
    %v974 = vmul.f32 %v971, 1.442695
    %v975 = vpow.pop %v974
    %v976 = vadd.f32 %v973, 1.0
    %v977 = vadd.f32 %v975, 1.0
    %v978 = vrcp.pop %v976
    %v979 = vmul.f32 %v976, %v978
    %v980 = vsub.f32 1.0, %v979
    %v981 = vmul.f32 %v978, %v980
    %v982 = vadd.f32 %v978, %v981
    %vm983 = vweird.f32 %v976
    %vm984 = vweird.f32 %v978
    %vm985 = vmor %vm983, %vm984
    %v986 = vsel %vm985, %v978, %v982
    %v987 = vand.u32 2147483647, %v976
    %vm988 = vcmp.eq.f32.partialorder %v987, 8.507059e+37
    %v989 = vand.u32 %v976, 2147483648
    %v990 = vor.u32 1.1754944e-38, %v989
    %v991 = vsel %vm988, %v990, %v986
    %v992 = vmul.f32 1.0, %v991
    %v993 = vrcp.pop %v977
    %v994 = vmul.f32 %v977, %v993
    %v995 = vsub.f32 1.0, %v994
    %v996 = vmul.f32 %v993, %v995
    %v997 = vadd.f32 %v993, %v996
    %vm998 = vweird.f32 %v977
    %vm999 = vweird.f32 %v993
    %vm1000 = vmor %vm998, %vm999
    %v1001 = vsel %vm1000, %v993, %v997
    %v1002 = vand.u32 2147483647, %v977
    %vm1003 = vcmp.eq.f32.partialorder %v1002, 8.507059e+37
    %v1004 = vand.u32 %v977, 2147483648
    %v1005 = vor.u32 1.1754944e-38, %v1004
    %v1006 = vsel %vm1003, %v1005, %v1001
    %v1007 = vmul.f32 1.0, %v1006
    %v1008 = vtanh.pop %v968
    %v1009 = vtanh.pop %v969
    %v1012 = vrot.slane %v911, 7
    %v1013 = vrot.slane %v912, 7
    %v1016 = vmul.f32 %v992, %v1012
    %v1017 = vmul.f32 %v1007, %v1013
    %1020 = vrot.lane.b32.xlu0 %v1008, 64
    %v1021 = vpop.permute.xlu0 %1020
    %1022 = vrot.lane.b32.xlu0 %v1009, 64
    %v1023 = vpop.permute.xlu0 %1022
    %v1026 = vmul.f32 %v992, %v1021
    %v1027 = vmul.f32 %v1007, %v1023
    %1030 = vrot.lane.b32.xlu0 %v1026, 32
    %v1031 = vpop.permute.xlu0 %1030
    %1032 = vrot.lane.b32.xlu0 %v1027, 32
    %v1033 = vpop.permute.xlu0 %1032
    %v1036 = vadd.f32 %v1016, %v1031
    %v1037 = vadd.f32 %v1017, %v1033
    %v1038 = vtanh.pop %v1036
    %v1039 = vtanh.pop %v1037
    %1042 = vrot.lane.b32.xlu0 %v1038, 64
    %v1043 = vpop.permute.xlu0 %1042
    %1044 = vrot.lane.b32.xlu0 %v1039, 64
    %v1045 = vpop.permute.xlu0 %1044
    %v1048 = vmul.f32 %v992, %v1043
    %v1049 = vmul.f32 %v1007, %v1045
    %1052 = vrot.lane.b32.xlu0 %v1048, 32
    %v1053 = vpop.permute.xlu0 %1052
    %1054 = vrot.lane.b32.xlu0 %v1049, 32
    %v1055 = vpop.permute.xlu0 %1054
    %vm1058 = vcmask 261127
    %1059 = vst.msk [vmem:[#allocation2] sm:$0x80] %vm1058, %v1053
    %1060 = vst.msk [vmem:[#allocation2 + $0x8] sm:$0x80] %vm1058, %v1055
    %v1061 = vld [vmem:[#allocation2] sm:$0xff]
    %v1062 = vld [vmem:[#allocation2 + $0x8] sm:$0xff]
    %v1063 = vmax.f32 %v1061, 0.0
    %v1064 = vmax.f32 %v1062, 0.0
    %v1065 = vld [vmem:[%s4] sm:$0xff]
    %v1066 = vld [vmem:[%s4 + $0x8] sm:$0xff]
    %v1067 = vld [vmem:[%s4 + $0x10] sm:$0xff]
    %v1068 = vld [vmem:[%s4 + $0x18] sm:$0xff]
    %v1069 = vld [vmem:[%s5] sm:$0x1]
    %v1071 = vperm.slane %v1069, 0
    %v1074 = vsel %vm40, %v1063, 0
    %v1077 = vsel %vm40, %v1064, 0
    %1079 = vmatpush.msra.mxu0 0.0
    %1080 = vmatpush.msra.mxu0 0.0
    %1081 = vmatpush.msra.mxu0 0.0
    %1082 = vmatpush.msra.mxu0 0.0
    %1083 = vmatpush.msra.mxu0 0.0
    %1084 = vmatpush.msra.mxu0 0.0
    %1085 = vmatpush.msra.mxu0 0.0
    %1086 = vmatpush.msra.mxu0 0.0
    %1087 = vmatpush.msra.mxu0 0.0
    %1088 = vmatpush.msra.mxu0 0.0
    %1089 = vmatpush.msra.mxu0 0.0
    %1090 = vmatpush.msra.mxu0 0.0
    %1091 = vmatpush.msra.mxu0 %v1068
    %1092 = vmatpush.msra.mxu0 %v1067
    %1093 = vmatpush.msra.mxu0 %v1066
    %1094 = vmatpush.msra.mxu0 %v1065
    %1095 = vmatmul.f32.gmra.mxu0 %v1074
    %v1096 = vpop.f32.mrf.mxu0
    %v1097 = vadd.f32 %v1071, %v1096
    %1098 = vmatmul.f32.gmra.mxu0 %v1077
    %v1099 = vpop.f32.mrf.mxu0
    %v1100 = vadd.f32 %v1071, %v1099
    %1101 = vdwg.mxu0
    %v1102 = vmax.f32 %v1097, 0.0
    %v1103 = vmax.f32 %v1100, 0.0
    %v1104 = vld [vmem:[%s6] sm:$0xff]
    %v1105 = vld [vmem:[%s6 + $0x8] sm:$0xff]
    %v1106 = vld [vmem:[%s6 + $0x10] sm:$0xff]
    %v1107 = vld [vmem:[%s6 + $0x18] sm:$0xff]
    %v1108 = vld [vmem:[%s6 + $0x20] sm:$0xff]
    %v1109 = vld [vmem:[%s6 + $0x28] sm:$0xff]
    %v1110 = vld [vmem:[%s6 + $0x30] sm:$0xff]
    %v1111 = vld [vmem:[%s6 + $0x38] sm:$0xff]
    %v1112 = vld [vmem:[%s6 + $0x40] sm:$0xff]
    %v1113 = vld [vmem:[%s6 + $0x48] sm:$0xff]
    %v1114 = vld [vmem:[%s6 + $0x50] sm:$0xff]
    %v1115 = vld [vmem:[%s6 + $0x58] sm:$0xff]
    %v1116 = vld [vmem:[%s6 + $0x60] sm:$0xff]
    %v1117 = vld [vmem:[%s6 + $0x68] sm:$0xff]
    %v1118 = vld [vmem:[%s6 + $0x70] sm:$0xff]
    %v1119 = vld [vmem:[%s6 + $0x78] sm:$0xff]
    %v1120 = vld [vmem:[%s7] sm:$0x1]
    %v1122 = vperm.slane %v1120, 0
    %1124 = vmatpush.msra.mxu0 %v1119
    %1125 = vmatpush.msra.mxu0 %v1118
    %1126 = vmatpush.msra.mxu0 %v1117
    %1127 = vmatpush.msra.mxu0 %v1116
    %1128 = vmatpush.msra.mxu0 %v1115
    %1129 = vmatpush.msra.mxu0 %v1114
    %1130 = vmatpush.msra.mxu0 %v1113
    %1131 = vmatpush.msra.mxu0 %v1112
    %1132 = vmatpush.msra.mxu0 %v1111
    %1133 = vmatpush.msra.mxu0 %v1110
    %1134 = vmatpush.msra.mxu0 %v1109
    %1135 = vmatpush.msra.mxu0 %v1108
    %1136 = vmatpush.msra.mxu0 %v1107
    %1137 = vmatpush.msra.mxu0 %v1106
    %1138 = vmatpush.msra.mxu0 %v1105
    %1139 = vmatpush.msra.mxu0 %v1104
    %1140 = vmatmul.f32.gmra.mxu0 %v1102
    %v1141 = vpop.f32.mrf.mxu0
    %v1142 = vadd.f32 %v1122, %v1141
    %1143 = vmatmul.f32.gmra.mxu0 %v1103
    %v1144 = vpop.f32.mrf.mxu0
    %v1145 = vadd.f32 %v1122, %v1144
    %1146 = vdwg.mxu0
    %vm1147 = vcmask 523264
    %1148 = vst.msk [vmem:[#allocation3] sm:$0xff] %vm1147, %v1142
    %1149 = vst.msk [vmem:[#allocation3 + $0x8] sm:$0xff] %vm1147, %v1145
    // Predicated region
    $region34: #{tpu_custom_call.1} parent=1 // pred_check
      _
    $region35: #{tpu_custom_call.1} parent=1 // pred_check_branch
      %1151 = sbr.rel (0) target = $region37
    $region36: #{tpu_custom_call.1} parent=1 // pred_region
      %1153 = vsyncadd [#allocation4], 0
      %s1154 = sshll.u32 [#allocation3], 4
      %s1155 = int_to_ptr.vmem [resolvable:$true] %s1154
      %s1156 = sshll.u32 %s8, 4
      %s1157 = int_to_ptr.hbm [resolvable:$true] %s1156
      %1162 = dma.vmem_to_hbm [thread:$0]  %s1155, 256, %s1157, [#allocation4], 128, 128, 8
    $region37: #{tpu_custom_call.1} parent=1 // pred_fallthru
      _
    // Predicated region
    $region38: #{tpu_custom_call.1} parent=1 // pred_check
      _
    $region39: #{tpu_custom_call.1} parent=1 // pred_check_branch
      %1164 = sbr.rel (0) target = $region41
    $region40: #{tpu_custom_call.1} parent=1 // pred_region
      %1166 = dma.done [#allocation4], 256
    $region41: #{tpu_custom_call.1} parent=1 // pred_fallthru
      _
    %1167 = vsyncpa [#allocation4], 1

</llo_original>
